<compile_context>
chip_gen: v6e
topology: v6e:2x2x1
jax: 0.10.0
libtpu: 0.0.40
codegen_flags: <defaults>
</compile_context>

<pallas_src>
import math

import jax
import jax.numpy as jnp
from jax import lax
from jax.experimental import pallas as pl
from jax.experimental.pallas import tpu as pltpu


_LANE = 128                   # TPU lane width
_T = 8                        # recurrence chunk = one f32 sublane group
_SHIFTS = (1, 2, 4)           # Hillis-Steele offsets within a chunk of 8
_ND = len(_SHIFTS) + 1        # scan-level tables + final lambda^{t+1} table


def _round_up(x, m):
    return ((x + m - 1) // m) * m


# ------------------------------ wrapper (glue) ------------------------------ #
def s5_forward(signal, prev_state, step_scale, params):
    """signal: (B, L, H) f32; prev_state: (B, P) (unused, see TODO above);
    step_scale: scalar or (B,) f32.  Returns (y (B,L,H) f32, x_last (B,P) complex64)."""
    del prev_state  # does not affect the outputs under the given semantics
    B_, L, H = signal.shape
    Lambda = params["Lambda"]        # (P,) complex64
    B_tilde = params["B"]            # (P, H) complex64
    C_tilde = params["C"]            # (H, P) complex64
    D = params["D"]                  # (H,) float32
    log_step = params["log_step"]    # (P,) float32
    P = Lambda.shape[0]

    # ------------------------- padded geometry (static) ------------------------
    Pp = _round_up(P, _LANE)                    # lane-dense state width
    Hp = _round_up(H, _LANE)                    # lane-dense feature width

    def _vmem_bytes(lblk):
        # double-buffered ins/outs + resident scratch, per grid step
        return (2 * lblk * Hp * 2                # sig block (bf16)
                + 2 * lblk * Hp * 4              # y block (f32)
                + 2 * _ND * _T * 2 * Pp * 4      # lambda-power tables
                + 2 * Hp * 2 * Pp * 2            # btcat (bf16)
                + 2 * 2 * Pp * Hp * 2            # ccat (bf16)
                + 2 * Hp * 4                     # D
                + 4 * 2 * Pp * 4                 # x_last re/im outputs
                + lblk * 2 * Pp * 4              # bu/xs scratch
                + 2 * Pp * 4)                    # carry

    Lp0 = _round_up(L, _T)
    LBLK = min(Lp0, 512)                        # big L-blocks: fewer grid steps, bigger DMAs
    while LBLK > 128 and _vmem_bytes(LBLK) > 44 * (1 << 20):   # stay safe on v7x 64 MiB
        LBLK = _round_up(LBLK // 2, _T)
    Lp = _round_up(Lp0, LBLK)
    n_lblk = Lp // LBLK
    n_chunks = LBLK // _T
    unroll_n = max(1, min(n_chunks, max(1, 1024 // Pp)))   # partial unroll for large Pp
    c_blk = (L - 1) // LBLK                     # L-block holding the true last timestep
    r_in_blk = (L - 1) % LBLK                   # its row inside that block
    vmem_limit = int(min(60 * (1 << 20), max(32 * (1 << 20), 2 * _vmem_bytes(LBLK))))

    # --------------------- bilinear discretization (cheap JAX) -----------------
    step_scale = jnp.asarray(step_scale, dtype=jnp.float32)
    if step_scale.ndim == 0:
        step_scale = jnp.ones((B_,), dtype=jnp.float32) * step_scale
    step = step_scale[:, None] * jnp.exp(log_step)                   # (B, P)
    half = (step / 2.0).astype(jnp.complex64)
    BL = 1.0 / (1.0 - half * Lambda)                                 # (B, P) complex
    Lambda_bar = BL * (1.0 + half * Lambda)                          # (B, P) complex
    scale = BL * step.astype(jnp.complex64)                          # (B, P) complex

    # ---- lambda-power scan tables -----------------------------------------------
    # Level for offset d: rows t>=d hold lambda^d, rows t<d are ZERO (so the wrapped
    # values from pltpu.roll are multiplied away).  Final table: lambda^{t+1} (carry).
    lam_pows = jnp.cumprod(
        jnp.broadcast_to(Lambda_bar[:, None, :], (B_, _T, P)), axis=1)      # lambda^1..^T
    t_idx = jnp.arange(_T)
    levels = []
    for d in _SHIFTS:
        mask = (t_idx >= d).astype(jnp.float32)[None, :, None]
        levels.append(jnp.broadcast_to(lam_pows[:, d - 1:d, :], (B_, _T, P)) * mask)
    levels.append(lam_pows)
    A_levels = jnp.concatenate(levels, axis=1)                              # (B, ND*T, P)
    alr = jnp.real(A_levels).astype(jnp.float32)
    ali = jnp.imag(A_levels).astype(jnp.float32)
    if Pp != P:
        alr = jnp.pad(alr, ((0, 0), (0, 0), (0, Pp - P)))
        ali = jnp.pad(ali, ((0, 0), (0, 0), (0, Pp - P)))
    acat = jnp.concatenate([alr, ali], axis=2)                              # (B, ND*T, 2Pp) f32

    # ---------- fused real/imag matmul operands (lane-padded, bf16 MXU) --------
    # B_bar^T built directly in (H, P) layout: btT[b,h,p] = B_tilde[p,h] * scale[b,p]
    btT = B_tilde.T[None, :, :] * scale[:, None, :]                         # (B, H, P) complex
    bt_re = jnp.real(btT).astype(jnp.float32)
    bt_im = jnp.imag(btT).astype(jnp.float32)
    if (Hp != H) or (Pp != P):
        bt_re = jnp.pad(bt_re, ((0, 0), (0, Hp - H), (0, Pp - P)))
        bt_im = jnp.pad(bt_im, ((0, 0), (0, Hp - H), (0, Pp - P)))
    btcat = jnp.concatenate([bt_re, bt_im], axis=2).astype(jnp.bfloat16)    # (B, Hp, 2Pp)

    ct_re = jnp.real(C_tilde).T.astype(jnp.float32)                         # (P, H)
    ct_im = jnp.imag(C_tilde).T.astype(jnp.float32)
    if (Hp != H) or (Pp != P):
        ct_re = jnp.pad(ct_re, ((0, Pp - P), (0, Hp - H)))
        ct_im = jnp.pad(ct_im, ((0, Pp - P), (0, Hp - H)))
    ccat = jnp.concatenate([ct_re, -ct_im], axis=0).astype(jnp.bfloat16)    # (2Pp, Hp)

    dvec = D.astype(jnp.float32)
    if Hp != H:
        dvec = jnp.pad(dvec, (0, Hp - H))
    dvec = dvec.reshape(1, Hp)                                              # (1, Hp) f32

    sig = signal
    if (Lp != L) or (Hp != H):
        sig = jnp.pad(sig, ((0, 0), (0, Lp - L), (0, Hp - H)))
    sig = sig.astype(jnp.bfloat16)                                          # (B, Lp, Hp)

    # ---------------------------------- kernel ---------------------------------
    def kernel(sig_ref,            # (1, LBLK, Hp)    bf16 input rows for this (b, lblock)
               a_ref,              # (1, ND*T, 2Pp)   f32 lambda-power tables [re | im]
               bt_ref,             # (1, Hp, 2Pp)     bf16 [B_bar^T re | B_bar^T im]
               cc_ref,             # (2Pp, Hp)        bf16 [C_re^T ; -C_im^T]   (shared)
               d_ref,              # (1, Hp)          f32 D                     (shared)
               y_ref,              # (1, LBLK, Hp)    f32 output rows
               xlr_ref, xli_ref,   # (1, 1, Pp)       final state re / im  (per batch)
               bu, carry):         # VMEM scratch: (LBLK, 2Pp) f32, (2, Pp) f32
        lc = pl.program_id(1)

        @pl.when(lc == 0)
        def _init():
            carry[...] = jnp.zeros_like(carry)

        # Fused Bu matmul on the MXU (bf16 in, f32 accumulate): [Bu_re | Bu_im]
        bu[...] = jnp.dot(sig_ref[0], bt_ref[0], preferred_element_type=jnp.float32)

        a_all = a_ref[0]                                         # (ND*T, 2Pp)
        lvl = [(a_all[k * _T:(k + 1) * _T, :Pp], a_all[k * _T:(k + 1) * _T, Pp:])
               for k in range(len(_SHIFTS))]
        pw_re = a_all[len(_SHIFTS) * _T:, :Pp]                   # lambda^{t+1}, (T, Pp)
        pw_im = a_all[len(_SHIFTS) * _T:, Pp:]

        def chunk_body(i, c):
            cr, ci = c                                           # carried state, (1, Pp)
            r0 = pl.multiple_of(i * _T, _T)
            br = bu[pl.ds(r0, _T), pl.ds(0, Pp)]                 # (T, Pp)
            bi = bu[pl.ds(r0, _T), pl.ds(Pp, Pp)]
            # within-chunk associative scan; wrapped rows are killed by zeroed tables
            for (ar, ai), d in zip(lvl, _SHIFTS):
                brs = pltpu.roll(br, shift=d, axis=0)
                bis = pltpu.roll(bi, shift=d, axis=0)
                br = ar * brs - ai * bis + br
                bi = ar * bis + ai * brs + bi
            # x_t = lambda^{t+1} * x_prev + sum_{s<=t} lambda^{t-s} Bu_s
            xr = br + pw_re * cr - pw_im * ci
            xi = bi + pw_re * ci + pw_im * cr
            bu[pl.ds(r0, _T), pl.ds(0, Pp)] = xr                 # overwrite Bu in place
            bu[pl.ds(r0, _T), pl.ds(Pp, Pp)] = xi
            return (xr[_T - 1:_T, :], xi[_T - 1:_T, :])

        cr_f, ci_f = lax.fori_loop(
            0, n_chunks, chunk_body,
            (carry[pl.ds(0, 1), :], carry[pl.ds(1, 1), :]),
            unroll=unroll_n)
        carry[pl.ds(0, 1), :] = cr_f
        carry[pl.ds(1, 1), :] = ci_f

        # Fused output matmul: real(C @ x) = [x_re | x_im] @ [C_re^T ; -C_im^T]
        y_ref[0] = (jnp.dot(bu[...].astype(jnp.bfloat16), cc_ref[...],
                            preferred_element_type=jnp.float32)
                    + d_ref[...] * sig_ref[0].astype(jnp.float32))

        # Capture the state at the true last timestep (L-1 may sit before L padding).
        @pl.when(lc == c_blk)
        def _grab_last():
            xlr_ref[0] = bu[pl.ds(r_in_blk, 1), pl.ds(0, Pp)]
            xli_ref[0] = bu[pl.ds(r_in_blk, 1), pl.ds(Pp, Pp)]

    grid_spec = pltpu.PrefetchScalarGridSpec(
        num_scalar_prefetch=0,
        grid=(B_, n_lblk),
        in_specs=[
            pl.BlockSpec((1, LBLK, Hp), lambda b, l: (b, l, 0)),        # signal rows
            pl.BlockSpec((1, _ND * _T, 2 * Pp), lambda b, l: (b, 0, 0)),  # lambda tables
            pl.BlockSpec((1, Hp, 2 * Pp), lambda b, l: (b, 0, 0)),      # [B^T re | im]
            pl.BlockSpec((2 * Pp, Hp), lambda b, l: (0, 0)),            # [C^T re ; -im]
            pl.BlockSpec((1, Hp), lambda b, l: (0, 0)),                 # D
        ],
        out_specs=[
            pl.BlockSpec((1, LBLK, Hp), lambda b, l: (b, l, 0)),        # y rows
            pl.BlockSpec((1, 1, Pp), lambda b, l: (b, 0, 0)),           # x_last re
            pl.BlockSpec((1, 1, Pp), lambda b, l: (b, 0, 0)),           # x_last im
        ],
        scratch_shapes=[
            pltpu.VMEM((LBLK, 2 * Pp), jnp.float32),    # Bu -> xs (reused in place)
            pltpu.VMEM((2, Pp), jnp.float32),           # recurrence carry across L-chunks
        ],
    )

    y_pad, xlr, xli = pl.pallas_call(
        kernel,
        grid_spec=grid_spec,
        out_shape=[
            jax.ShapeDtypeStruct((B_, Lp, Hp), jnp.float32),
            jax.ShapeDtypeStruct((B_, 1, Pp), jnp.float32),
            jax.ShapeDtypeStruct((B_, 1, Pp), jnp.float32),
        ],
        compiler_params=pltpu.CompilerParams(
            dimension_semantics=("parallel", "arbitrary"),
            vmem_limit_bytes=vmem_limit),
    )(sig, acat, btcat, ccat, dvec)

    y = y_pad if (Lp == L and Hp == H) else y_pad[:, :L, :H]
    x_last = lax.complex(xlr[:, 0, :P], xli[:, 0, :P])   # (B, P) complex64
    return y, x_last


# ------------------------- pure-JAX reference (check) ------------------------ #
def s5_reference(signal, step_scale, params):
    Lambda, B_tilde, C_tilde = params["Lambda"], params["B"], params["C"]
    D, log_step = params["D"], params["log_step"]
    B_, L, H = signal.shape
    step_scale = jnp.ones((B_,), jnp.float32) * jnp.asarray(step_scale, jnp.float32)
    step = step_scale[:, None] * jnp.exp(log_step)
    half = (step / 2.0).astype(jnp.complex64)
    BL = 1.0 / (1.0 - half * Lambda)
    Lambda_bar = BL * (1.0 + half * Lambda)
    B_bar = (BL * step.astype(jnp.complex64))[..., None] * B_tilde
    Bu = jnp.einsum("bph,blh->blp", B_bar, signal.astype(jnp.complex64))

    def per_batch(lam, bu):
        def f(x, bu_t):
            x = lam * x + bu_t
            return x, x
        _, xs = lax.scan(f, jnp.zeros_like(lam), bu)
        return xs

    xs = jax.vmap(per_batch)(Lambda_bar, Bu)                        # (B, L, P) complex
    y = jnp.real(jnp.einsum("hp,blp->blh", C_tilde, xs)) + D * signal
    return y.astype(jnp.float32), xs[:, -1, :]


# --------------------------------- helpers ----------------------------------- #
def _make_params(key, P, H, dt_min=0.001, dt_max=0.1):
    k_b, k_c, k_d, k_step = jax.random.split(key, 4)
    lam_re = -0.5 * jnp.ones((P,), jnp.float32)
    lam_im = math.pi * jnp.arange(P, dtype=jnp.float32)
    B_real = jax.random.normal(k_b, (P, H, 2), jnp.float32) / math.sqrt(2 * H)
    C_real = jax.random.normal(k_c, (H, P, 2), jnp.float32) / math.sqrt(2 * P)
    return {
        "Lambda": lax.complex(lam_re, lam_im),                          # (P,)
        "B": lax.complex(B_real[..., 0], B_real[..., 1]),               # (P, H)
        "C": lax.complex(C_real[..., 0], C_real[..., 1]),               # (H, P)
        "D": jax.random.uniform(k_d, (H,), jnp.float32),                # (H,)
        "log_step": jax.random.uniform(
            k_step, (P,), jnp.float32,
            minval=math.log(dt_min), maxval=math.log(dt_max)),          # (P,)
    }


def _run_case(key, Bsz, L, H, P, step_scale, atol=3e-2, rtol=3e-2):
    k_par, k_sig = jax.random.split(key, 2)
    params = _make_params(k_par, P, H)
    signal = jax.random.normal(k_sig, (Bsz, L, H), jnp.float32)
    prev_state = jnp.zeros((Bsz, P), jnp.float32)       # S5.initial_state(batch_size)

    y, x_last = s5_forward(signal, prev_state, step_scale, params)
    y = jax.block_until_ready(y)
    x_last = jax.block_until_ready(x_last)

    y_ref, x_last_ref = s5_reference(signal, step_scale, params)
    assert y.shape == (Bsz, L, H) and x_last.shape == (Bsz, P)
    # bf16 MXU operands => looser tolerance than the f32 reference (scan stays f32).
    assert jnp.allclose(y, y_ref, atol=atol, rtol=rtol), "y mismatch vs reference"
    assert jnp.allclose(jnp.real(x_last), jnp.real(x_last_ref), atol=atol, rtol=rtol)
    assert jnp.allclose(jnp.imag(x_last), jnp.imag(x_last_ref), atol=atol, rtol=rtol)


# ---------------------------------- main ------------------------------------ #
if __name__ == "__main__":
    key = jax.random.PRNGKey(0)
    k1, k2, k3 = jax.random.split(key, 3)

    # Primary small config consistent with the module: width = state_width = 32,
    # seq = 8, batch = 2, scalar step_scale.
    _run_case(k1, Bsz=2, L=8, H=32, P=32, step_scale=1.0)

    # Secondary config exercising L/H/P padding and a per-batch step_scale vector.
    _run_case(k2, Bsz=3, L=12, H=20, P=24,
              step_scale=jnp.array([1.0, 0.5, 2.0], jnp.float32))

    # Longer sequence exercising multiple 512-row L-blocks, the cross-block carry
    # and the partially-unrolled chunk loop.
    _run_case(k3, Bsz=2, L=520, H=32, P=32, step_scale=1.0)

    print("KERNEL_OK")
</pallas_src>

<mosaic_0001>
module attributes {stable_mosaic.version = 11 : i64} {
  func.func @kernel(%arg0: i32, %arg1: i32, %arg2: memref<1x8x128xbf16, #tpu.memory_space<vmem>>, %arg3: memref<1x32x256xf32, #tpu.memory_space<vmem>>, %arg4: memref<1x128x256xbf16, #tpu.memory_space<vmem>>, %arg5: memref<256x128xbf16, #tpu.memory_space<vmem>>, %arg6: memref<1x128xf32, #tpu.memory_space<vmem>>, %arg7: memref<1x8x128xf32, #tpu.memory_space<vmem>>, %arg8: memref<1x1x128xf32, #tpu.memory_space<vmem>>, %arg9: memref<1x1x128xf32, #tpu.memory_space<vmem>>, %arg10: memref<8x256xf32, #tpu.memory_space<vmem>>, %arg11: memref<2x128xf32, #tpu.memory_space<vmem>>) attributes {dimension_semantics = [#tpu.dimension_semantics<parallel>, #tpu.dimension_semantics<arbitrary>], iteration_bounds = array<i64: 2, 1>, scalar_prefetch = 0 : i64, scratch_operands = 2 : i64, tpu.core_type = #tpu.core_type<tc>, window_params = [{transform_indices = @transform_0, window_bounds = array<i64: 1, 8, 128>}, {transform_indices = @transform_1, window_bounds = array<i64: 1, 32, 256>}, {transform_indices = @transform_2, window_bounds = array<i64: 1, 128, 256>}, {pipeline_mode = #tpu.pipeline_mode<synchronous>, transform_indices = @transform_3, window_bounds = array<i64: 256, 128>}, {pipeline_mode = #tpu.pipeline_mode<synchronous>, transform_indices = @transform_4, window_bounds = array<i64: 1, 128>}, {transform_indices = @transform_5, window_bounds = array<i64: 1, 8, 128>}, {transform_indices = @transform_6, window_bounds = array<i64: 1, 1, 128>}, {transform_indices = @transform_7, window_bounds = array<i64: 1, 1, 128>}]} {
    %c0_i32 = arith.constant 0 : i32
    %0 = arith.cmpi eq, %arg1, %c0_i32 : i32
    %1 = arith.extui %0 : i1 to i32
    %c0_i32_0 = arith.constant 0 : i32
    %2 = arith.cmpi ne, %1, %c0_i32_0 : i32
    scf.if %2 {
      %cst_41 = arith.constant 0.000000e+00 : f32
      %94 = vector.broadcast %cst_41 : f32 to vector<2x128xf32>
      %c0_42 = arith.constant 0 : index
      %c0_43 = arith.constant 0 : index
      %95 = vector.load %arg11[%c0_42, %c0_43] : memref<2x128xf32, #tpu.memory_space<vmem>>, vector<2x128xf32>
      tpu.vector_store %arg11[%c0_42, %c0_43], %94 {strides = array<i32>} : memref<2x128xf32, #tpu.memory_space<vmem>>, vector<2x128xf32>,
    } else {
    }
    %c0 = arith.constant 0 : index
    %c0_1 = arith.constant 0 : index
    %c0_2 = arith.constant 0 : index
    %3 = vector.load %arg2[%c0, %c0_1, %c0_2] : memref<1x8x128xbf16, #tpu.memory_space<vmem>>, vector<1x8x128xbf16>
    %4 = vector.shape_cast %3 : vector<1x8x128xbf16> to vector<8x128xbf16>
    %c0_3 = arith.constant 0 : index
    %c0_4 = arith.constant 0 : index
    %c0_5 = arith.constant 0 : index
    %5 = vector.load %arg4[%c0_3, %c0_4, %c0_5] : memref<1x128x256xbf16, #tpu.memory_space<vmem>>, vector<1x128x256xbf16>
    %6 = vector.shape_cast %5 : vector<1x128x256xbf16> to vector<128x256xbf16>
    %cst = arith.constant dense<0.000000e+00> : vector<8x256xf32>
    %7 = tpu.matmul %4, %6, %cst {dimension_numbers = #tpu.dot_dimension_numbers<[1], [0], [0], [1], [0, 0, 1, 1], [], []>} : vector<8x128xbf16>, vector<128x256xbf16>, vector<8x256xf32> -> vector<8x256xf32>
    %c0_6 = arith.constant 0 : index
    %c0_7 = arith.constant 0 : index
    %8 = vector.load %arg10[%c0_6, %c0_7] : memref<8x256xf32, #tpu.memory_space<vmem>>, vector<8x256xf32>
    tpu.vector_store %arg10[%c0_6, %c0_7], %7 {strides = array<i32>} : memref<8x256xf32, #tpu.memory_space<vmem>>, vector<8x256xf32>,
    %c0_8 = arith.constant 0 : index
    %c0_9 = arith.constant 0 : index
    %c0_10 = arith.constant 0 : index
    %9 = vector.load %arg3[%c0_8, %c0_9, %c0_10] : memref<1x32x256xf32, #tpu.memory_space<vmem>>, vector<1x32x256xf32>
    %10 = vector.shape_cast %9 : vector<1x32x256xf32> to vector<32x256xf32>
    %11 = vector.extract_strided_slice %10 {offsets = [0, 0], sizes = [8, 128], strides = [1, 1]} : vector<32x256xf32> to vector<8x128xf32>
    %12 = vector.extract_strided_slice %10 {offsets = [0, 128], sizes = [8, 128], strides = [1, 1]} : vector<32x256xf32> to vector<8x128xf32>
    %13 = vector.extract_strided_slice %10 {offsets = [8, 0], sizes = [8, 128], strides = [1, 1]} : vector<32x256xf32> to vector<8x128xf32>
    %14 = vector.extract_strided_slice %10 {offsets = [8, 128], sizes = [8, 128], strides = [1, 1]} : vector<32x256xf32> to vector<8x128xf32>
    %15 = vector.extract_strided_slice %10 {offsets = [16, 0], sizes = [8, 128], strides = [1, 1]} : vector<32x256xf32> to vector<8x128xf32>
    %16 = vector.extract_strided_slice %10 {offsets = [16, 128], sizes = [8, 128], strides = [1, 1]} : vector<32x256xf32> to vector<8x128xf32>
    %17 = vector.extract_strided_slice %10 {offsets = [24, 0], sizes = [8, 128], strides = [1, 1]} : vector<32x256xf32> to vector<8x128xf32>
    %18 = vector.extract_strided_slice %10 {offsets = [24, 128], sizes = [8, 128], strides = [1, 1]} : vector<32x256xf32> to vector<8x128xf32>
    %c0_11 = arith.constant 0 : index
    %c0_12 = arith.constant 0 : index
    %19 = vector.load %arg11[%c0_11, %c0_12] : memref<2x128xf32, #tpu.memory_space<vmem>>, vector<1x128xf32>
    %c1 = arith.constant 1 : index
    %c0_13 = arith.constant 0 : index
    %20 = vector.load %arg11[%c1, %c0_13] : memref<2x128xf32, #tpu.memory_space<vmem>>, vector<1x128xf32>
    %c0_i32_14 = arith.constant 0 : i32
    %c8_i32 = arith.constant 8 : i32
    %21 = arith.muli %c0_i32_14, %c8_i32 : i32
    %22 = tpu.assume_multiple %21, 8 : i32
    %23 = arith.index_cast %22 : i32 to index
    %c0_15 = arith.constant 0 : index
    %24 = vector.load %arg10[%23, %c0_15] : memref<8x256xf32, #tpu.memory_space<vmem>>, vector<8x128xf32>
    %25 = arith.index_cast %22 : i32 to index
    %c128 = arith.constant 128 : index
    %26 = vector.load %arg10[%25, %c128] : memref<8x256xf32, #tpu.memory_space<vmem>>, vector<8x128xf32>
    %c1_i32 = arith.constant 1 : i32
    %27 = tpu.dynamic_rotate %24 by %c1_i32 dim 0 : vector<8x128xf32>, i32 -> vector<8x128xf32>
    %c1_i32_16 = arith.constant 1 : i32
    %28 = tpu.dynamic_rotate %26 by %c1_i32_16 dim 0 : vector<8x128xf32>, i32 -> vector<8x128xf32>
    %29 = arith.mulf %11, %27 : vector<8x128xf32>
    %30 = arith.mulf %12, %28 : vector<8x128xf32>
    %31 = arith.subf %29, %30 : vector<8x128xf32>
    %32 = arith.addf %31, %24 : vector<8x128xf32>
    %33 = arith.mulf %11, %28 : vector<8x128xf32>
    %34 = arith.mulf %12, %27 : vector<8x128xf32>
    %35 = arith.addf %33, %34 : vector<8x128xf32>
    %36 = arith.addf %35, %26 : vector<8x128xf32>
    %c2_i32 = arith.constant 2 : i32
    %37 = tpu.dynamic_rotate %32 by %c2_i32 dim 0 : vector<8x128xf32>, i32 -> vector<8x128xf32>
    %c2_i32_17 = arith.constant 2 : i32
    %38 = tpu.dynamic_rotate %36 by %c2_i32_17 dim 0 : vector<8x128xf32>, i32 -> vector<8x128xf32>
    %39 = arith.mulf %13, %37 : vector<8x128xf32>
    %40 = arith.mulf %14, %38 : vector<8x128xf32>
    %41 = arith.subf %39, %40 : vector<8x128xf32>
    %42 = arith.addf %41, %32 : vector<8x128xf32>
    %43 = arith.mulf %13, %38 : vector<8x128xf32>
    %44 = arith.mulf %14, %37 : vector<8x128xf32>
    %45 = arith.addf %43, %44 : vector<8x128xf32>
    %46 = arith.addf %45, %36 : vector<8x128xf32>
    %c4_i32 = arith.constant 4 : i32
    %47 = tpu.dynamic_rotate %42 by %c4_i32 dim 0 : vector<8x128xf32>, i32 -> vector<8x128xf32>
    %c4_i32_18 = arith.constant 4 : i32
    %48 = tpu.dynamic_rotate %46 by %c4_i32_18 dim 0 : vector<8x128xf32>, i32 -> vector<8x128xf32>
    %49 = arith.mulf %15, %47 : vector<8x128xf32>
    %50 = arith.mulf %16, %48 : vector<8x128xf32>
    %51 = arith.subf %49, %50 : vector<8x128xf32>
    %52 = arith.addf %51, %42 : vector<8x128xf32>
    %53 = arith.mulf %15, %48 : vector<8x128xf32>
    %54 = arith.mulf %16, %47 : vector<8x128xf32>
    %55 = arith.addf %53, %54 : vector<8x128xf32>
    %56 = arith.addf %55, %46 : vector<8x128xf32>
    %57 = vector.broadcast %19 : vector<1x128xf32> to vector<8x128xf32>
    %58 = arith.mulf %17, %57 : vector<8x128xf32>
    %59 = arith.addf %52, %58 : vector<8x128xf32>
    %60 = vector.broadcast %20 : vector<1x128xf32> to vector<8x128xf32>
    %61 = arith.mulf %18, %60 : vector<8x128xf32>
    %62 = arith.subf %59, %61 : vector<8x128xf32>
    %63 = vector.broadcast %20 : vector<1x128xf32> to vector<8x128xf32>
    %64 = arith.mulf %17, %63 : vector<8x128xf32>
    %65 = arith.addf %56, %64 : vector<8x128xf32>
    %66 = vector.broadcast %19 : vector<1x128xf32> to vector<8x128xf32>
    %67 = arith.mulf %18, %66 : vector<8x128xf32>
    %68 = arith.addf %65, %67 : vector<8x128xf32>
    %69 = arith.index_cast %22 : i32 to index
    %c0_19 = arith.constant 0 : index
    %70 = vector.load %arg10[%69, %c0_19] : memref<8x256xf32, #tpu.memory_space<vmem>>, vector<8x128xf32>
    tpu.vector_store %arg10[%69, %c0_19], %62 {strides = array<i32>} : memref<8x256xf32, #tpu.memory_space<vmem>>, vector<8x128xf32>,
    %71 = arith.index_cast %22 : i32 to index
    %c128_20 = arith.constant 128 : index
    %72 = vector.load %arg10[%71, %c128_20] : memref<8x256xf32, #tpu.memory_space<vmem>>, vector<8x128xf32>
    tpu.vector_store %arg10[%71, %c128_20], %68 {strides = array<i32>} : memref<8x256xf32, #tpu.memory_space<vmem>>, vector<8x128xf32>,
    %73 = vector.extract_strided_slice %62 {offsets = [7, 0], sizes = [1, 128], strides = [1, 1]} : vector<8x128xf32> to vector<1x128xf32>
    %74 = vector.extract_strided_slice %68 {offsets = [7, 0], sizes = [1, 128], strides = [1, 1]} : vector<8x128xf32> to vector<1x128xf32>
    %c1_i32_21 = arith.constant 1 : i32
    %c0_22 = arith.constant 0 : index
    %c0_23 = arith.constant 0 : index
    %75 = vector.load %arg11[%c0_22, %c0_23] : memref<2x128xf32, #tpu.memory_space<vmem>>, vector<1x128xf32>
    tpu.vector_store %arg11[%c0_22, %c0_23], %73 {strides = array<i32>} : memref<2x128xf32, #tpu.memory_space<vmem>>, vector<1x128xf32>,
    %c1_24 = arith.constant 1 : index
    %c0_25 = arith.constant 0 : index
    %76 = vector.load %arg11[%c1_24, %c0_25] : memref<2x128xf32, #tpu.memory_space<vmem>>, vector<1x128xf32>
    tpu.vector_store %arg11[%c1_24, %c0_25], %74 {strides = array<i32>} : memref<2x128xf32, #tpu.memory_space<vmem>>, vector<1x128xf32>,
    %c0_26 = arith.constant 0 : index
    %c0_27 = arith.constant 0 : index
    %77 = vector.load %arg10[%c0_26, %c0_27] : memref<8x256xf32, #tpu.memory_space<vmem>>, vector<8x256xf32>
    %78 = arith.truncf %77 : vector<8x256xf32> to vector<8x256xbf16>
    %c0_28 = arith.constant 0 : index
    %c0_29 = arith.constant 0 : index
    %79 = vector.load %arg5[%c0_28, %c0_29] : memref<256x128xbf16, #tpu.memory_space<vmem>>, vector<256x128xbf16>
    %cst_30 = arith.constant dense<0.000000e+00> : vector<8x128xf32>
    %80 = tpu.matmul %78, %79, %cst_30 {dimension_numbers = #tpu.dot_dimension_numbers<[1], [0], [0], [1], [0, 0, 1, 1], [], []>} : vector<8x256xbf16>, vector<256x128xbf16>, vector<8x128xf32> -> vector<8x128xf32>
    %c0_31 = arith.constant 0 : index
    %c0_32 = arith.constant 0 : index
    %81 = vector.load %arg6[%c0_31, %c0_32] : memref<1x128xf32, #tpu.memory_space<vmem>>, vector<1x128xf32>
    %c0_33 = arith.constant 0 : index
    %c0_34 = arith.constant 0 : index
    %c0_35 = arith.constant 0 : index
    %82 = vector.load %arg2[%c0_33, %c0_34, %c0_35] : memref<1x8x128xbf16, #tpu.memory_space<vmem>>, vector<1x8x128xbf16>
    %83 = vector.shape_cast %82 : vector<1x8x128xbf16> to vector<8x128xbf16>
    %84 = arith.extf %83 : vector<8x128xbf16> to vector<8x128xf32>
    %85 = vector.broadcast %81 : vector<1x128xf32> to vector<8x128xf32>
    %86 = arith.mulf %85, %84 : vector<8x128xf32>
    %87 = arith.addf %80, %86 : vector<8x128xf32>
    %c0_36 = arith.constant 0 : index
    %c0_37 = arith.constant 0 : index
    %c0_38 = arith.constant 0 : index
    %88 = vector.load %arg7[%c0_36, %c0_37, %c0_38] : memref<1x8x128xf32, #tpu.memory_space<vmem>>, vector<1x8x128xf32>
    %89 = vector.shape_cast %88 : vector<1x8x128xf32> to vector<8x128xf32>
    %90 = vector.shape_cast %87 : vector<8x128xf32> to vector<1x8x128xf32>
    tpu.vector_store %arg7[%c0_36, %c0_37, %c0_38], %90 {strides = array<i32>} : memref<1x8x128xf32, #tpu.memory_space<vmem>>, vector<1x8x128xf32>,
    %c0_i32_39 = arith.constant 0 : i32
    %91 = arith.cmpi eq, %arg1, %c0_i32_39 : i32
    %92 = arith.extui %91 : i1 to i32
    %c0_i32_40 = arith.constant 0 : i32
    %93 = arith.cmpi ne, %92, %c0_i32_40 : i32
    scf.if %93 {
      %c7 = arith.constant 7 : index
      %c0_41 = arith.constant 0 : index
      %94 = vector.load %arg10[%c7, %c0_41] : memref<8x256xf32, #tpu.memory_space<vmem>>, vector<1x128xf32>
      %c0_42 = arith.constant 0 : index
      %c0_43 = arith.constant 0 : index
      %c0_44 = arith.constant 0 : index
      %95 = vector.load %arg8[%c0_42, %c0_43, %c0_44] : memref<1x1x128xf32, #tpu.memory_space<vmem>>, vector<1x1x128xf32>
      %96 = vector.shape_cast %95 : vector<1x1x128xf32> to vector<1x128xf32>
      %97 = vector.shape_cast %94 : vector<1x128xf32> to vector<1x1x128xf32>
      tpu.vector_store %arg8[%c0_42, %c0_43, %c0_44], %97 {strides = array<i32>} : memref<1x1x128xf32, #tpu.memory_space<vmem>>, vector<1x1x128xf32>,
      %c7_45 = arith.constant 7 : index
      %c128_46 = arith.constant 128 : index
      %98 = vector.load %arg10[%c7_45, %c128_46] : memref<8x256xf32, #tpu.memory_space<vmem>>, vector<1x128xf32>
      %c0_47 = arith.constant 0 : index
      %c0_48 = arith.constant 0 : index
      %c0_49 = arith.constant 0 : index
      %99 = vector.load %arg9[%c0_47, %c0_48, %c0_49] : memref<1x1x128xf32, #tpu.memory_space<vmem>>, vector<1x1x128xf32>
      %100 = vector.shape_cast %99 : vector<1x1x128xf32> to vector<1x128xf32>
      %101 = vector.shape_cast %98 : vector<1x128xf32> to vector<1x1x128xf32>
      tpu.vector_store %arg9[%c0_47, %c0_48, %c0_49], %101 {strides = array<i32>} : memref<1x1x128xf32, #tpu.memory_space<vmem>>, vector<1x1x128xf32>,
    } else {
    }
    return
  }
  func.func @transform_0(%arg0: i32, %arg1: i32) -> (i32, i32, i32) {
    %c0_i32 = arith.constant 0 : i32
    %c0_i32_0 = arith.constant 0 : i32
    return %arg0, %arg1, %c0_i32 : i32, i32, i32
  }
  func.func @transform_1(%arg0: i32, %arg1: i32) -> (i32, i32, i32) {
    %c0_i32 = arith.constant 0 : i32
    %c0_i32_0 = arith.constant 0 : i32
    %c0_i32_1 = arith.constant 0 : i32
    return %arg0, %c0_i32, %c0_i32_0 : i32, i32, i32
  }
  func.func @transform_2(%arg0: i32, %arg1: i32) -> (i32, i32, i32) {
    %c0_i32 = arith.constant 0 : i32
    %c0_i32_0 = arith.constant 0 : i32
    %c0_i32_1 = arith.constant 0 : i32
    return %arg0, %c0_i32, %c0_i32_0 : i32, i32, i32
  }
  func.func @transform_3(%arg0: i32, %arg1: i32) -> (i32, i32) {
    %c0_i32 = arith.constant 0 : i32
    %c0_i32_0 = arith.constant 0 : i32
    %c0_i32_1 = arith.constant 0 : i32
    return %c0_i32, %c0_i32_0 : i32, i32
  }
  func.func @transform_4(%arg0: i32, %arg1: i32) -> (i32, i32) {
    %c0_i32 = arith.constant 0 : i32
    %c0_i32_0 = arith.constant 0 : i32
    %c0_i32_1 = arith.constant 0 : i32
    return %c0_i32, %c0_i32_0 : i32, i32
  }
  func.func @transform_5(%arg0: i32, %arg1: i32) -> (i32, i32, i32) {
    %c0_i32 = arith.constant 0 : i32
    %c0_i32_0 = arith.constant 0 : i32
    return %arg0, %arg1, %c0_i32 : i32, i32, i32
  }
  func.func @transform_6(%arg0: i32, %arg1: i32) -> (i32, i32, i32) {
    %c0_i32 = arith.constant 0 : i32
    %c0_i32_0 = arith.constant 0 : i32
    %c0_i32_1 = arith.constant 0 : i32
    return %arg0, %c0_i32, %c0_i32_0 : i32, i32, i32
  }
  func.func @transform_7(%arg0: i32, %arg1: i32) -> (i32, i32, i32) {
    %c0_i32 = arith.constant 0 : i32
    %c0_i32_0 = arith.constant 0 : i32
    %c0_i32_1 = arith.constant 0 : i32
    return %arg0, %c0_i32, %c0_i32_0 : i32, i32, i32
  }
}

</mosaic_0001>

<llo_original>
// kernel: tpu_custom_call.1
$region0: #{tpu_custom_call.1}
  #allocation0 [shape = 'u32[]', space=smem, size = 0x4, offset = 0x4, fixed_abs, tag = 'smem constant byte address 0x4 - core index']
  #allocation1 [shape = 'u32[144,128]{1,0:T(1,128)}', space=vmem, size = 0x12000, scoped, tag = 'internal scratch']
  #allocation2 [shape = 'f32[8,256]{1,0:T(8,128)}', space=vmem, size = 0x2000, scoped, tag = 'scratch operand']
  #allocation3 [shape = 'f32[2,128]{1,0:T(2,128)}', space=vmem, size = 0x400, scoped, tag = 'scratch operand']
  %s0 = inlined_call_operand.hbm [shape: bf16[2,8,128], index: 0, kind: input, shape index: {}]
  %s1 = inlined_call_operand.hbm [shape: f32[2,32,256], index: 1, kind: input, shape index: {}]
  %s2 = inlined_call_operand.hbm [shape: bf16[2,128,256], index: 2, kind: input, shape index: {}]
  %s3 = inlined_call_operand.hbm [shape: bf16[256,128], index: 3, kind: input, shape index: {}]
  %s4 = inlined_call_operand.vmem [shape: f32[1,128], index: 4, kind: input, shape index: {}]
  %s5 = inlined_call_operand.hbm [shape: f32[2,8,128], index: 5, kind: output, shape index: {0}]
  %s6 = inlined_call_operand.hbm [shape: f32[2,1,128], index: 6, kind: output, shape index: {1}]
  %s7 = inlined_call_operand.hbm [shape: f32[2,1,128], index: 7, kind: output, shape index: {2}]
  %8 = xla_tuple %s5, %s6, %s7
  %s9 = sld [smem:[#allocation0]]
  $region93: #{tpu_custom_call.1} parent=0
    _
  %s11 = ssub.s32 1, %s9
  %s12 = scalar_select 0, %s11, %s9
  $region1: #{tpu_custom_call.1} parent=0
    #allocation4 [shape = 'u8[4096]{0}', space=vmem, size = 0x1000, scoped, tag = 'input window, operand 0']
    #allocation5 [shape = 's32[2]{0}', space=sflag, size = 0x8, scoped, tag = 'scoped memory for tpu_custom_call.1']
    #allocation6 [shape = 's32[2]{0}', space=sflag, size = 0x8, scoped, tag = 'scoped memory for tpu_custom_call.1']
    #allocation7 [shape = 'u8[65536]{0}', space=vmem, size = 0x10000, scoped, tag = 'input window, operand 1']
    #allocation8 [shape = 's32[2]{0}', space=sflag, size = 0x8, scoped, tag = 'scoped memory for tpu_custom_call.1']
    #allocation9 [shape = 'u8[131072]{0}', space=vmem, size = 0x20000, scoped, tag = 'input window, operand 2']
    #allocation10 [shape = 'u8[65536]{0}', space=vmem, size = 0x10000, scoped, tag = 'input window, operand 3, single buffered']
    #allocation11 [shape = 's32[1]{0}', space=sflag, size = 0x4, scoped, tag = 'scoped memory for tpu_custom_call.1']
    #allocation12 [shape = 'u8[8192]{0}', space=vmem, size = 0x2000, scoped, tag = 'output window, operand 0']
    #allocation13 [shape = 'u8[1024]{0}', space=vmem, size = 0x400, scoped, tag = 'output window, operand 1']
    #allocation14 [shape = 's32[2]{0}', space=sflag, size = 0x8, scoped, tag = 'scoped memory for tpu_custom_call.1']
    #allocation15 [shape = 'u8[1024]{0}', space=vmem, size = 0x400, scoped, tag = 'output window, operand 2']
    %13 = vsyncpa [#allocation5], 0
    %s14 = scalar_lea.sflag [#allocation5], 1
    %15 = vsyncpa %s14, 0
    %16 = vsyncpa [#allocation8], 0
    %s17 = scalar_lea.sflag [#allocation8], 1
    %18 = vsyncpa %s17, 0
    %19 = vsyncpa [#allocation11], 0
    %20 = vsyncpa [#allocation6], 0
    %s21 = scalar_lea.sflag [#allocation6], 1
    %22 = vsyncpa %s21, 0
    %23 = vsyncpa [#allocation14], 0
    %s24 = scalar_lea.sflag [#allocation14], 1
    %25 = vsyncpa %s24, 0
    loop: start=0, step=1, limit=4
    $region2: #{tpu_custom_call.1} parent=1 // loop_pre_header
      _
    $region3: #{tpu_custom_call.1} parent=1 // loop_header
      %s27 = sphi 0, %s31
      %p28 = scmp.ge.s32.totalorder %s27, 4
      %s34 = sphi 0, %s46
      %s35 = sphi 0, %s42
      %s36 = sphi 0, %s34
      %s37 = sphi 0, %s35
      %s38 = sphi 0, %s36
      %s39 = sphi 0, %s37
      %s51 = sphi 0, %s53
      %s54 = sphi 0, %s51
      %s55 = sphi 0, %s54
      %s71 = sphi 0, %s55
      %s77 = sphi 0, %s79
      %s80 = sphi 0, %s77
      %s81 = sphi 0, %s80
      %s97 = sphi 0, %s81
      %s103 = sphi 0, %s105
      %s106 = sphi 0, %s103
      %s107 = sphi 0, %s106
      %s123 = sphi 0, %s107
      %s127 = sphi 0, %s127
      %s129 = sphi 0, %s127
      %s130 = sphi 0, %s129
      %s144 = sphi 0, %s130
      %s148 = sphi 0, %s148
      %s150 = sphi 0, %s148
      %s151 = sphi 0, %s150
      %s165 = sphi 0, %s151
      %s173 = sphi 0, %s175
      %s176 = sphi 0, %s173
      %s177 = sphi 0, %s176
      %s193 = sphi 0, %s177
      %s199 = sphi 0, %s201
      %s202 = sphi 0, %s199
      %s203 = sphi 0, %s202
      %s219 = sphi 0, %s203
      %s225 = sphi 0, %s227
      %s228 = sphi 0, %s225
      %s229 = sphi 0, %s228
      %s245 = sphi 0, %s229
    $region4: #{tpu_custom_call.1} parent=1 // loop_header_branch
      %30 = sbr.rel (%p28) target = $region8
    $region5: #{tpu_custom_call.1} parent=1 // loop_body
      %s32 = ssub.s32 %s27, 1
      %s33 = ssub.s32 %s27, 2
      %s40 = sadd.s32 1, %s35
      %p41 = scmp.ge.s32.totalorder %s40, 1
      %s42 = scalar_select %p41, 0, %s40
      %s43 = sadd.s32 1, %s34
      %s44 = scalar_select %p41, %s43, %s34
      %p45 = scmp.ge.s32.totalorder %s44, 2
      %s46 = scalar_select %p45, 0, %s44
      %s47 = ssub.s32 %s34, %s46
      %s48 = ssub.s32 %s35, %s42
      %s49 = sor.u32 %s47, %s48
      %p50 = scmp.eq.s32.totalorder %s49, 0
      %s52 = sadd.s32 %s51, 1
      %s53 = scalar_select %p50, %s51, %s52
      %p56 = pneg %p50
      %p57 = scmp.eq.s32.totalorder %s27, 1
      %p58 = por %p56, %p57
      %p59 = scmp.ne.s32.totalorder %s51, %s54
      %p60 = scmp.eq.s32.totalorder %s27, 0
      %p61 = por %p59, %p60
      %p62 = scmp.ne.s32.totalorder %s51, %s54
      %p63 = scmp.eq.s32.totalorder %s32, 1
      %p64 = por %p62, %p63
      %p65 = scmp.ne.s32.totalorder %s54, %s55
      %p66 = scmp.eq.s32.totalorder %s32, 0
      %p67 = por %p65, %p66
      %p68 = scmp.ne.s32.totalorder %s54, %s55
      %p69 = scmp.eq.s32.totalorder %s33, 1
      %p70 = por %p68, %p69
      %p72 = scmp.ne.s32.totalorder %s55, %s71
      %p73 = scmp.eq.s32.totalorder %s33, 0
      %p74 = por %p72, %p73
      %s75 = ssub.s32 %s34, %s46
      %p76 = scmp.eq.s32.totalorder %s75, 0
      %s78 = sadd.s32 %s77, 1
      %s79 = scalar_select %p76, %s77, %s78
      %p82 = pneg %p76
      %p83 = scmp.eq.s32.totalorder %s27, 1
      %p84 = por %p82, %p83
      %p85 = scmp.ne.s32.totalorder %s77, %s80
      %p86 = scmp.eq.s32.totalorder %s27, 0
      %p87 = por %p85, %p86
      %p88 = scmp.ne.s32.totalorder %s77, %s80
      %p89 = scmp.eq.s32.totalorder %s32, 1
      %p90 = por %p88, %p89
      %p91 = scmp.ne.s32.totalorder %s80, %s81
      %p92 = scmp.eq.s32.totalorder %s32, 0
      %p93 = por %p91, %p92
      %p94 = scmp.ne.s32.totalorder %s80, %s81
      %p95 = scmp.eq.s32.totalorder %s33, 1
      %p96 = por %p94, %p95
      %p98 = scmp.ne.s32.totalorder %s81, %s97
      %p99 = scmp.eq.s32.totalorder %s33, 0
      %p100 = por %p98, %p99
      %s101 = ssub.s32 %s34, %s46
      %p102 = scmp.eq.s32.totalorder %s101, 0
      %s104 = sadd.s32 %s103, 1
      %s105 = scalar_select %p102, %s103, %s104
      %p108 = pneg %p102
      %p109 = scmp.eq.s32.totalorder %s27, 1
      %p110 = por %p108, %p109
      %p111 = scmp.ne.s32.totalorder %s103, %s106
      %p112 = scmp.eq.s32.totalorder %s27, 0
      %p113 = por %p111, %p112
      %p114 = scmp.ne.s32.totalorder %s103, %s106
      %p115 = scmp.eq.s32.totalorder %s32, 1
      %p116 = por %p114, %p115
      %p117 = scmp.ne.s32.totalorder %s106, %s107
      %p118 = scmp.eq.s32.totalorder %s32, 0
      %p119 = por %p117, %p118
      %p120 = scmp.ne.s32.totalorder %s106, %s107
      %p121 = scmp.eq.s32.totalorder %s33, 1
      %p122 = por %p120, %p121
      %p124 = scmp.ne.s32.totalorder %s107, %s123
      %p125 = scmp.eq.s32.totalorder %s33, 0
      %p126 = por %p124, %p125
      %s128 = sadd.s32 %s127, 1
      %p131 = scmp.eq.s32.totalorder %s27, 1
      %p132 = scmp.ne.s32.totalorder %s127, %s129
      %p133 = scmp.eq.s32.totalorder %s27, 0
      %p134 = por %p132, %p133
      %p135 = scmp.ne.s32.totalorder %s127, %s129
      %p136 = scmp.eq.s32.totalorder %s32, 1
      %p137 = por %p135, %p136
      %p138 = scmp.ne.s32.totalorder %s129, %s130
      %p139 = scmp.eq.s32.totalorder %s32, 0
      %p140 = por %p138, %p139
      %p141 = scmp.ne.s32.totalorder %s129, %s130
      %p142 = scmp.eq.s32.totalorder %s33, 1
      %p143 = por %p141, %p142
      %p145 = scmp.ne.s32.totalorder %s130, %s144
      %p146 = scmp.eq.s32.totalorder %s33, 0
      %p147 = por %p145, %p146
      %s149 = sadd.s32 %s148, 1
      %p152 = scmp.eq.s32.totalorder %s27, 1
      %p153 = scmp.ne.s32.totalorder %s148, %s150
      %p154 = scmp.eq.s32.totalorder %s27, 0
      %p155 = por %p153, %p154
      %p156 = scmp.ne.s32.totalorder %s148, %s150
      %p157 = scmp.eq.s32.totalorder %s32, 1
      %p158 = por %p156, %p157
      %p159 = scmp.ne.s32.totalorder %s150, %s151
      %p160 = scmp.eq.s32.totalorder %s32, 0
      %p161 = por %p159, %p160
      %p162 = scmp.ne.s32.totalorder %s150, %s151
      %p163 = scmp.eq.s32.totalorder %s33, 1
      %p164 = por %p162, %p163
      %p166 = scmp.ne.s32.totalorder %s151, %s165
      %p167 = scmp.eq.s32.totalorder %s33, 0
      %p168 = por %p166, %p167
      %s169 = ssub.s32 %s34, %s46
      %s170 = ssub.s32 %s35, %s42
      %s171 = sor.u32 %s169, %s170
      %p172 = scmp.eq.s32.totalorder %s171, 0
      %s174 = sadd.s32 %s173, 1
      %s175 = scalar_select %p172, %s173, %s174
      %p178 = pneg %p172
      %p179 = scmp.eq.s32.totalorder %s27, 1
      %p180 = por %p178, %p179
      %p181 = scmp.ne.s32.totalorder %s173, %s176
      %p182 = scmp.eq.s32.totalorder %s27, 0
      %p183 = por %p181, %p182
      %p184 = scmp.ne.s32.totalorder %s173, %s176
      %p185 = scmp.eq.s32.totalorder %s32, 1
      %p186 = por %p184, %p185
      %p187 = scmp.ne.s32.totalorder %s176, %s177
      %p188 = scmp.eq.s32.totalorder %s32, 0
      %p189 = por %p187, %p188
      %p190 = scmp.ne.s32.totalorder %s176, %s177
      %p191 = scmp.eq.s32.totalorder %s33, 1
      %p192 = por %p190, %p191
      %p194 = scmp.ne.s32.totalorder %s177, %s193
      %p195 = scmp.eq.s32.totalorder %s33, 0
      %p196 = por %p194, %p195
      %s197 = ssub.s32 %s34, %s46
      %p198 = scmp.eq.s32.totalorder %s197, 0
      %s200 = sadd.s32 %s199, 1
      %s201 = scalar_select %p198, %s199, %s200
      %p204 = pneg %p198
      %p205 = scmp.eq.s32.totalorder %s27, 1
      %p206 = por %p204, %p205
      %p207 = scmp.ne.s32.totalorder %s199, %s202
      %p208 = scmp.eq.s32.totalorder %s27, 0
      %p209 = por %p207, %p208
      %p210 = scmp.ne.s32.totalorder %s199, %s202
      %p211 = scmp.eq.s32.totalorder %s32, 1
      %p212 = por %p210, %p211
      %p213 = scmp.ne.s32.totalorder %s202, %s203
      %p214 = scmp.eq.s32.totalorder %s32, 0
      %p215 = por %p213, %p214
      %p216 = scmp.ne.s32.totalorder %s202, %s203
      %p217 = scmp.eq.s32.totalorder %s33, 1
      %p218 = por %p216, %p217
      %p220 = scmp.ne.s32.totalorder %s203, %s219
      %p221 = scmp.eq.s32.totalorder %s33, 0
      %p222 = por %p220, %p221
      %s223 = ssub.s32 %s34, %s46
      %p224 = scmp.eq.s32.totalorder %s223, 0
      %s226 = sadd.s32 %s225, 1
      %s227 = scalar_select %p224, %s225, %s226
      %p230 = pneg %p224
      %p231 = scmp.eq.s32.totalorder %s27, 1
      %p232 = por %p230, %p231
      %p233 = scmp.ne.s32.totalorder %s225, %s228
      %p234 = scmp.eq.s32.totalorder %s27, 0
      %p235 = por %p233, %p234
      %p236 = scmp.ne.s32.totalorder %s225, %s228
      %p237 = scmp.eq.s32.totalorder %s32, 1
      %p238 = por %p236, %p237
      %p239 = scmp.ne.s32.totalorder %s228, %s229
      %p240 = scmp.eq.s32.totalorder %s32, 0
      %p241 = por %p239, %p240
      %p242 = scmp.ne.s32.totalorder %s228, %s229
      %p243 = scmp.eq.s32.totalorder %s33, 1
      %p244 = por %p242, %p243
      %p246 = scmp.ne.s32.totalorder %s229, %s245
      %p247 = scmp.eq.s32.totalorder %s33, 0
      %p248 = por %p246, %p247
      %p249 = scmp.le.s32.totalorder 1, %s27
      %p250 = scmp.lt.s32.totalorder %s27, 3
      %p251 = pnand %p249, %p250
      %p252 = pneg %p251
      // Predicated region
      $region9: #{tpu_custom_call.1} parent=5 // pred_check
        _
      $region10: #{tpu_custom_call.1} parent=5 // pred_check_branch
        %254 = sbr.rel (%p251) target = $region12
      $region11: #{tpu_custom_call.1} parent=5 // pred_region
        %s255 = ssub.s32 %s27, 1
        // Predicated region
        $region13: #{tpu_custom_call.1} parent=11 // pred_check
          %p256 = pneg %p140
        $region14: #{tpu_custom_call.1} parent=11 // pred_check_branch
          %258 = sbr.rel (%p256) target = $region16
        $region15: #{tpu_custom_call.1} parent=11 // pred_region
          %s260 = ssub.s32 2048, 2048
          %261 = vsyncadd [#allocation11], %s260
          %s262 = sshll.u32 [#allocation10], 4
          %s263 = int_to_ptr.vmem [resolvable:$true] %s262
          %268 = dma.hbm_to_vmem [thread:$0]  %s3, 2048, %s263, [#allocation11], 64, 64, 4
        $region16: #{tpu_custom_call.1} parent=11 // pred_fallthru
          _
        // Predicated region
        $region17: #{tpu_custom_call.1} parent=11 // pred_check
          %p269 = pneg %p161
        $region18: #{tpu_custom_call.1} parent=11 // pred_check_branch
          %271 = sbr.rel (%p269) target = $region20
        $region19: #{tpu_custom_call.1} parent=11 // pred_region
          _
        $region20: #{tpu_custom_call.1} parent=11 // pred_fallthru
          _
      $region12: #{tpu_custom_call.1} parent=5 // pred_fallthru
        _
      %p272 = scmp.lt.s32.totalorder %s27, 2
      // Predicated region
      $region21: #{tpu_custom_call.1} parent=5 // pred_check
        %p273 = pneg %p272
      $region22: #{tpu_custom_call.1} parent=5 // pred_check_branch
        %275 = sbr.rel (%p273) target = $region24
      $region23: #{tpu_custom_call.1} parent=5 // pred_region
        // Predicated region
        $region25: #{tpu_custom_call.1} parent=23 // pred_check
          %p276 = pneg %p61
        $region26: #{tpu_custom_call.1} parent=23 // pred_check_branch
          %278 = sbr.rel (%p276) target = $region28
        $region27: #{tpu_custom_call.1} parent=23 // pred_region
          %s279 = sand.u32 %s51, 1
          %s280 = scalar_lea.sflag [#allocation5], %s279
          %s281 = sand.u32 %s51, 1
          %s282 = smul.addr %s281, 4
          %s283 = scalar_lea.vmem [#allocation4], %s282
          %s285 = ssub.s32 64, 64
          %286 = vsyncadd %s280, %s285
          %s287 = sadd.s32 %s35, %s34
          %s288 = smul.addr %s287, 64
          %s289 = scalar_lea.hbm %s0, %s288
          %s291 = sshll.u32 %s283, 4
          %s292 = int_to_ptr.vmem [resolvable:$true] %s291
          %294 = dma.hbm_to_vmem [thread:$0]  %s289, 64, %s292, %s280
        $region28: #{tpu_custom_call.1} parent=23 // pred_fallthru
          _
        // Predicated region
        $region29: #{tpu_custom_call.1} parent=23 // pred_check
          %p295 = pneg %p87
        $region30: #{tpu_custom_call.1} parent=23 // pred_check_branch
          %297 = sbr.rel (%p295) target = $region32
        $region31: #{tpu_custom_call.1} parent=23 // pred_region
          %s298 = sand.u32 %s27, 1
          %s299 = scalar_lea.sflag [#allocation8], %s298
          %s300 = sand.u32 %s77, 1
          %s301 = smul.addr %s300, 64
          %s302 = scalar_lea.vmem [#allocation7], %s301
          %s304 = ssub.s32 1024, 1024
          %305 = vsyncadd %s299, %s304
          %s306 = smul.addr %s34, 8
          %s307 = smul.addr %s306, 128
          %s308 = scalar_lea.hbm %s1, %s307
          %s309 = sshll.u32 %s302, 4
          %s310 = int_to_ptr.vmem [resolvable:$true] %s309
          %315 = dma.hbm_to_vmem [thread:$0]  %s308, 1024, %s310, %s299, 256, 256, 16
        $region32: #{tpu_custom_call.1} parent=23 // pred_fallthru
          _
        // Predicated region
        $region33: #{tpu_custom_call.1} parent=23 // pred_check
          %p316 = pneg %p113
        $region34: #{tpu_custom_call.1} parent=23 // pred_check_branch
          %318 = sbr.rel (%p316) target = $region36
        $region35: #{tpu_custom_call.1} parent=23 // pred_region
          %s319 = sand.u32 %s27, 1
          %s320 = scalar_lea.sflag [#allocation8], %s319
          %s321 = sand.u32 %s103, 1
          %s322 = smul.addr %s321, 128
          %s323 = scalar_lea.vmem [#allocation9], %s322
          %s325 = ssub.s32 2048, 2048
          %326 = vsyncadd %s320, %s325
          %s327 = smul.addr %s34, 32
          %s328 = smul.addr %s327, 64
          %s329 = scalar_lea.hbm %s2, %s328
          %s330 = sshll.u32 %s323, 4
          %s331 = int_to_ptr.vmem [resolvable:$true] %s330
          %336 = dma.hbm_to_vmem [thread:$0]  %s329, 2048, %s331, %s320, 128, 128, 8
        $region36: #{tpu_custom_call.1} parent=23 // pred_fallthru
          _
      $region24: #{tpu_custom_call.1} parent=5 // pred_fallthru
        _
      %p337 = scmp.le.s32.totalorder 1, %s27
      %p338 = scmp.lt.s32.totalorder %s27, 3
      %p339 = pnand %p337, %p338
      %p340 = pneg %p339
      // Predicated region
      $region37: #{tpu_custom_call.1} parent=5 // pred_check
        _
      $region38: #{tpu_custom_call.1} parent=5 // pred_check_branch
        %342 = sbr.rel (%p339) target = $region40
      $region39: #{tpu_custom_call.1} parent=5 // pred_region
        %s343 = ssub.s32 %s27, 1
        %s344 = sand.u32 %s54, 1
        %s345 = scalar_lea.sflag [#allocation5], %s344
        %s346 = sand.u32 %s54, 1
        %s347 = smul.addr %s346, 4
        %s348 = scalar_lea.vmem [#allocation4], %s347
        // Predicated region
        $region41: #{tpu_custom_call.1} parent=39 // pred_check
          %p349 = pneg %p67
        $region42: #{tpu_custom_call.1} parent=39 // pred_check_branch
          %351 = sbr.rel (%p349) target = $region44
        $region43: #{tpu_custom_call.1} parent=39 // pred_region
          %352 = dma.done %s345, 64
        $region44: #{tpu_custom_call.1} parent=39 // pred_fallthru
          _
        %s353 = sand.u32 %s32, 1
        %s354 = scalar_lea.sflag [#allocation8], %s353
        %s355 = sand.u32 %s80, 1
        %s356 = smul.addr %s355, 64
        %s357 = scalar_lea.vmem [#allocation7], %s356
        // Predicated region
        $region45: #{tpu_custom_call.1} parent=39 // pred_check
          %p358 = pneg %p93
        $region46: #{tpu_custom_call.1} parent=39 // pred_check_branch
          %360 = sbr.rel (%p358) target = $region48
        $region47: #{tpu_custom_call.1} parent=39 // pred_region
          %361 = dma.done %s354, 1024
        $region48: #{tpu_custom_call.1} parent=39 // pred_fallthru
          _
        %s362 = sand.u32 %s32, 1
        %s363 = scalar_lea.sflag [#allocation8], %s362
        %s364 = sand.u32 %s106, 1
        %s365 = smul.addr %s364, 128
        %s366 = scalar_lea.vmem [#allocation9], %s365
        // Predicated region
        $region49: #{tpu_custom_call.1} parent=39 // pred_check
          %p367 = pneg %p119
        $region50: #{tpu_custom_call.1} parent=39 // pred_check_branch
          %369 = sbr.rel (%p367) target = $region52
        $region51: #{tpu_custom_call.1} parent=39 // pred_region
          %370 = dma.done %s363, 2048
        $region52: #{tpu_custom_call.1} parent=39 // pred_fallthru
          _
        // Predicated region
        $region53: #{tpu_custom_call.1} parent=39 // pred_check
          %p371 = pneg %p140
        $region54: #{tpu_custom_call.1} parent=39 // pred_check_branch
          %373 = sbr.rel (%p371) target = $region56
        $region55: #{tpu_custom_call.1} parent=39 // pred_region
          %374 = dma.done [#allocation11], 2048
        $region56: #{tpu_custom_call.1} parent=39 // pred_fallthru
          _
        %s375 = sand.u32 %s54, 1
        %s376 = scalar_lea.sflag [#allocation5], %s375
        %s377 = sand.u32 %s54, 1
        %s378 = smul.addr %s377, 4
        %s379 = scalar_lea.vmem [#allocation4], %s378
        %p380 = pneg %p67
        %p381 = pneg %p64
        %s382 = sand.u32 %s32, 1
        %s383 = scalar_lea.sflag [#allocation8], %s382
        %s384 = sand.u32 %s80, 1
        %s385 = smul.addr %s384, 64
        %s386 = scalar_lea.vmem [#allocation7], %s385
        %p387 = pneg %p93
        %p388 = pneg %p90
        %s389 = sand.u32 %s32, 1
        %s390 = scalar_lea.sflag [#allocation8], %s389
        %s391 = sand.u32 %s106, 1
        %s392 = smul.addr %s391, 128
        %s393 = scalar_lea.vmem [#allocation9], %s392
        %p394 = pneg %p119
        %p395 = pneg %p116
        %p396 = pneg %p140
        %p397 = pneg %p137
        %p398 = pneg %p161
        %p399 = pneg %p158
        %p400 = pneg %p189
        %p401 = pneg %p186
        %s402 = sand.u32 %s176, 1
        %s403 = scalar_lea.sflag [#allocation6], %s402
        %s404 = sand.u32 %s176, 1
        %s405 = smul.addr %s404, 8
        %s406 = scalar_lea.vmem [#allocation12], %s405
        %p407 = pneg %p215
        %p408 = pneg %p212
        %s409 = sand.u32 %s32, 1
        %s410 = scalar_lea.sflag [#allocation14], %s409
        %s411 = sand.u32 %s202, 1
        %s412 = scalar_lea.vmem [#allocation13], %s411
        %p413 = pneg %p241
        %p414 = pneg %p238
        %s415 = sand.u32 %s32, 1
        %s416 = scalar_lea.sflag [#allocation14], %s415
        %s417 = sand.u32 %s228, 1
        %s418 = scalar_lea.vmem [#allocation15], %s417
        %p420 = scmp.eq.s32.totalorder %s37, 0
        // Predicated region
        $region57: #{tpu_custom_call.1} parent=39 // pred_check
          %p421 = pneg %p420
        $region58: #{tpu_custom_call.1} parent=39 // pred_check_branch
          %423 = sbr.rel (%p421) target = $region60
        $region59: #{tpu_custom_call.1} parent=39 // pred_region
          %424 = vst [vmem:[#allocation3] sm:$0x3] 0.0
        $region60: #{tpu_custom_call.1} parent=39 // pred_fallthru
          _
        %v425 = vld [vmem:[%s348] sm:$0xf]
        %v426 = vld [vmem:[%s366] sm:$0xff]
        %v427 = vld [vmem:[%s366 + $0x8] sm:$0xff]
        %v428 = vld [vmem:[%s366 + $0x10] sm:$0xff]
        %v429 = vld [vmem:[%s366 + $0x18] sm:$0xff]
        %v430 = vld [vmem:[%s366 + $0x20] sm:$0xff]
        %v431 = vld [vmem:[%s366 + $0x28] sm:$0xff]
        %v432 = vld [vmem:[%s366 + $0x30] sm:$0xff]
        %v433 = vld [vmem:[%s366 + $0x38] sm:$0xff]
        %v434 = vld [vmem:[%s366 + $0x40] sm:$0xff]
        %v435 = vld [vmem:[%s366 + $0x48] sm:$0xff]
        %v436 = vld [vmem:[%s366 + $0x50] sm:$0xff]
        %v437 = vld [vmem:[%s366 + $0x58] sm:$0xff]
        %v438 = vld [vmem:[%s366 + $0x60] sm:$0xff]
        %v439 = vld [vmem:[%s366 + $0x68] sm:$0xff]
        %v440 = vld [vmem:[%s366 + $0x70] sm:$0xff]
        %v441 = vld [vmem:[%s366 + $0x78] sm:$0xff]
        %v458 = vunpack.c.l.b16 %v426
        %v459 = vunpack.c.h.b16 %v426
        %v460 = vunpack.c.l.b16 %v427
        %v461 = vunpack.c.h.b16 %v427
        %v462 = vunpack.c.l.b16 %v428
        %v463 = vunpack.c.h.b16 %v428
        %v464 = vunpack.c.l.b16 %v429
        %v465 = vunpack.c.h.b16 %v429
        %v466 = vunpack.c.l.b16 %v430
        %v467 = vunpack.c.h.b16 %v430
        %v468 = vunpack.c.l.b16 %v431
        %v469 = vunpack.c.h.b16 %v431
        %v470 = vunpack.c.l.b16 %v432
        %v471 = vunpack.c.h.b16 %v432
        %v472 = vunpack.c.l.b16 %v433
        %v473 = vunpack.c.h.b16 %v433
        %v474 = vunpack.c.l.b16 %v434
        %v475 = vunpack.c.h.b16 %v434
        %v476 = vunpack.c.l.b16 %v435
        %v477 = vunpack.c.h.b16 %v435
        %v478 = vunpack.c.l.b16 %v436
        %v479 = vunpack.c.h.b16 %v436
        %v480 = vunpack.c.l.b16 %v437
        %v481 = vunpack.c.h.b16 %v437
        %v482 = vunpack.c.l.b16 %v438
        %v483 = vunpack.c.h.b16 %v438
        %v484 = vunpack.c.l.b16 %v439
        %v485 = vunpack.c.h.b16 %v439
        %v486 = vunpack.c.l.b16 %v440
        %v487 = vunpack.c.h.b16 %v440
        %v488 = vunpack.c.l.b16 %v441
        %v489 = vunpack.c.h.b16 %v441
        %v490 = vpack.c.b16 %v460, %v458
        %v491 = vpack.c.b16 %v461, %v459
        %v492 = vpack.c.b16 %v464, %v462
        %v493 = vpack.c.b16 %v465, %v463
        %v494 = vpack.c.b16 %v468, %v466
        %v495 = vpack.c.b16 %v469, %v467
        %v496 = vpack.c.b16 %v472, %v470
        %v497 = vpack.c.b16 %v473, %v471
        %v498 = vpack.c.b16 %v476, %v474
        %v499 = vpack.c.b16 %v477, %v475
        %v500 = vpack.c.b16 %v480, %v478
        %v501 = vpack.c.b16 %v481, %v479
        %v502 = vpack.c.b16 %v484, %v482
        %v503 = vpack.c.b16 %v485, %v483
        %v504 = vpack.c.b16 %v488, %v486
        %v505 = vpack.c.b16 %v489, %v487
        %522 = vmatprep.subr.bf16.mxu0 %v505
        %523 = vmatpush1.bf16.msra.mxu0 %v504
        %524 = vmatprep.subr.bf16.mxu0 %v503
        %525 = vmatpush1.bf16.msra.mxu0 %v502
        %526 = vmatprep.subr.bf16.mxu0 %v501
        %527 = vmatpush1.bf16.msra.mxu0 %v500
        %528 = vmatprep.subr.bf16.mxu0 %v499
        %529 = vmatpush1.bf16.msra.mxu0 %v498
        %530 = vmatprep.subr.bf16.mxu0 %v497
        %531 = vmatpush1.bf16.msra.mxu0 %v496
        %532 = vmatprep.subr.bf16.mxu0 %v495
        %533 = vmatpush1.bf16.msra.mxu0 %v494
        %534 = vmatprep.subr.bf16.mxu0 %v493
        %535 = vmatpush1.bf16.msra.mxu0 %v492
        %536 = vmatprep.subr.bf16.mxu0 %v491
        %537 = vmatpush1.bf16.msra.mxu0 %v490
        %538 = vmatprep.subr.bf16.mxu0 0
        %539 = vmatpush2.bf16.msra.mxu0 0
        %540 = vmatprep.subr.bf16.mxu0 0
        %541 = vmatpush2.bf16.msra.mxu0 0
        %542 = vmatprep.subr.bf16.mxu0 0
        %543 = vmatpush2.bf16.msra.mxu0 0
        %544 = vmatprep.subr.bf16.mxu0 0
        %545 = vmatpush2.bf16.msra.mxu0 0
        %546 = vmatprep.subr.bf16.mxu0 0
        %547 = vmatpush2.bf16.msra.mxu0 0
        %548 = vmatprep.subr.bf16.mxu0 0
        %549 = vmatpush2.bf16.msra.mxu0 0
        %550 = vmatprep.subr.bf16.mxu0 0
        %551 = vmatpush2.bf16.msra.mxu0 0
        %552 = vmatprep.subr.bf16.mxu0 0
        %553 = vmatpush2.bf16.msra.mxu0 0
        %554 = vmatprep.mubr.bf16.mxu0 0
        %555 = vmatmul.mubr.bf16.gmra.mxu0 %v425
        %v556 = vpop.f32.mrf.mxu0
        %v557 = vadd.f32 0.0, %v556
        %v558 = vpop.f32.mrf.mxu0
        %v559 = vadd.f32 0.0, %v558
        %v560 = vpop.f32.mrf.mxu0
        %v561 = vpop.f32.mrf.mxu0
        %562 = vdwg.mxu0
        %563 = vst [vmem:[#allocation2] sm:$0xff] %v557
        %564 = vst [vmem:[#allocation2 + $0x8] sm:$0xff] %v559
        %v565 = vld [vmem:[%s357] sm:$0xff]
        %v566 = vld [vmem:[%s357 + $0x8] sm:$0xff]
        %v567 = vld [vmem:[%s357 + $0x10] sm:$0xff]
        %v568 = vld [vmem:[%s357 + $0x18] sm:$0xff]
        %v569 = vld [vmem:[%s357 + $0x20] sm:$0xff]
        %v570 = vld [vmem:[%s357 + $0x28] sm:$0xff]
        %v571 = vld [vmem:[%s357 + $0x30] sm:$0xff]
        %v572 = vld [vmem:[%s357 + $0x38] sm:$0xff]
        %v573 = vld [vmem:[#allocation3] sm:$0x1]
        %v574 = vld [vmem:[#allocation3 + $0x1] sm:$0x1]
        %s575 = smul.u32 0, 2
        %s576 = smul.addr %s575, 8
        %s577 = scalar_lea.vmem [#allocation2], %s576
        %v578 = vld [vmem:[%s577] sm:$0xff]
        %v579 = vld [vmem:[%s577 + $0x8] sm:$0xff]
        %v580 = vrot.slane %v578, 7
        %v581 = vrot.slane %v579, 7
        %v582 = vmul.f32 %v565, %v580
        %v583 = vmul.f32 %v566, %v581
        %v584 = vsub.f32 %v582, %v583
        %v585 = vadd.f32 %v584, %v578
        %v586 = vmul.f32 %v565, %v581
        %v587 = vmul.f32 %v566, %v580
        %v588 = vadd.f32 %v586, %v587
        %v589 = vadd.f32 %v588, %v579
        %v590 = vrot.slane %v585, 6
        %v591 = vrot.slane %v589, 6
        %v592 = vmul.f32 %v567, %v590
        %v593 = vmul.f32 %v568, %v591
        %v594 = vsub.f32 %v592, %v593
        %v595 = vadd.f32 %v594, %v585
        %v596 = vmul.f32 %v567, %v591
        %v597 = vmul.f32 %v568, %v590
        %v598 = vadd.f32 %v596, %v597
        %v599 = vadd.f32 %v598, %v589
        %v600 = vrot.slane %v595, 4
        %v601 = vrot.slane %v599, 4
        %v602 = vmul.f32 %v569, %v600
        %v603 = vmul.f32 %v570, %v601
        %v604 = vsub.f32 %v602, %v603
        %v605 = vadd.f32 %v604, %v595
        %v606 = vmul.f32 %v569, %v601
        %v607 = vmul.f32 %v570, %v600
        %v608 = vadd.f32 %v606, %v607
        %v609 = vadd.f32 %v608, %v599
        %v610 = vlaneseq
        %v611 = vshrl.u32 %v610, 7
        %v612 = vsub.s32 0, %v611
        %v613 = vrot.slane %v573, %v612
        %v614 = vmul.f32 %v571, %v613
        %v615 = vadd.f32 %v605, %v614
        %v616 = vlaneseq
        %v617 = vshrl.u32 %v616, 7
        %v618 = vsub.s32 0, %v617
        %v619 = vrot.slane %v574, %v618
        %v620 = vmul.f32 %v572, %v619
        %v621 = vsub.f32 %v615, %v620
        %v622 = vmul.f32 %v571, %v619
        %v623 = vadd.f32 %v609, %v622
        %v624 = vmul.f32 %v572, %v613
        %v625 = vadd.f32 %v623, %v624
        %626 = vst [vmem:[%s577] sm:$0xff] %v621
        %627 = vst [vmem:[%s577 + $0x8] sm:$0xff] %v625
        %628 = vst [vmem:[#allocation3 - $0x7] sm:$0x80] %v621
        %629 = vst [vmem:[#allocation3 - $0x6] sm:$0x80] %v625
        %v630 = vld [vmem:[#allocation2] sm:$0xff]
        %v631 = vld [vmem:[#allocation2 + $0x8] sm:$0xff]
        %v632 = vpack.c.bf16 %v630, %v630
        %v633 = vpack.c.bf16 %v631, %v631
        %v634 = vld [vmem:[#allocation10] sm:$0xf]
        %v635 = vld [vmem:[#allocation10 + $0x4] sm:$0xf]
        %v636 = vld [vmem:[#allocation10 + $0x8] sm:$0xf]
        %v637 = vld [vmem:[#allocation10 + $0xc] sm:$0xf]
        %v638 = vld [vmem:[#allocation10 + $0x10] sm:$0xf]
        %v639 = vld [vmem:[#allocation10 + $0x14] sm:$0xf]
        %v640 = vld [vmem:[#allocation10 + $0x18] sm:$0xf]
        %v641 = vld [vmem:[#allocation10 + $0x1c] sm:$0xf]
        %v642 = vld [vmem:[#allocation10 + $0x20] sm:$0xf]
        %v643 = vld [vmem:[#allocation10 + $0x24] sm:$0xf]
        %v644 = vld [vmem:[#allocation10 + $0x28] sm:$0xf]
        %v645 = vld [vmem:[#allocation10 + $0x2c] sm:$0xf]
        %v646 = vld [vmem:[#allocation10 + $0x30] sm:$0xf]
        %v647 = vld [vmem:[#allocation10 + $0x34] sm:$0xf]
        %v648 = vld [vmem:[#allocation10 + $0x38] sm:$0xf]
        %v649 = vld [vmem:[#allocation10 + $0x3c] sm:$0xf]
        %v650 = vld [vmem:[#allocation10 + $0x40] sm:$0xf]
        %v651 = vld [vmem:[#allocation10 + $0x44] sm:$0xf]
        %v652 = vld [vmem:[#allocation10 + $0x48] sm:$0xf]
        %v653 = vld [vmem:[#allocation10 + $0x4c] sm:$0xf]
        %v654 = vld [vmem:[#allocation10 + $0x50] sm:$0xf]
        %v655 = vld [vmem:[#allocation10 + $0x54] sm:$0xf]
        %v656 = vld [vmem:[#allocation10 + $0x58] sm:$0xf]
        %v657 = vld [vmem:[#allocation10 + $0x5c] sm:$0xf]
        %v658 = vld [vmem:[#allocation10 + $0x60] sm:$0xf]
        %v659 = vld [vmem:[#allocation10 + $0x64] sm:$0xf]
        %v660 = vld [vmem:[#allocation10 + $0x68] sm:$0xf]
        %v661 = vld [vmem:[#allocation10 + $0x6c] sm:$0xf]
        %v662 = vld [vmem:[#allocation10 + $0x70] sm:$0xf]
        %v663 = vld [vmem:[#allocation10 + $0x74] sm:$0xf]
        %v664 = vld [vmem:[#allocation10 + $0x78] sm:$0xf]
        %v665 = vld [vmem:[#allocation10 + $0x7c] sm:$0xf]
        %v666 = vld [vmem:[%s4] sm:$0x1]
        %v667 = vld [vmem:[%s348] sm:$0xf]
        %v668 = vunpack.c.l.bf16 %v667
        %v670 = vlaneseq
        %v671 = vshrl.u32 %v670, 7
        %v672 = vsub.s32 0, %v671
        %v673 = vrot.slane %v666, %v672
        %v675 = vmul.f32 %v673, %v668
        %v708 = vunpack.c.l.b16 %v634
        %v709 = vunpack.c.l.b16 %v635
        %v710 = vunpack.c.l.b16 %v636
        %v711 = vunpack.c.l.b16 %v637
        %v712 = vunpack.c.l.b16 %v638
        %v713 = vunpack.c.l.b16 %v639
        %v714 = vunpack.c.l.b16 %v640
        %v715 = vunpack.c.l.b16 %v641
        %v716 = vunpack.c.l.b16 %v642
        %v717 = vunpack.c.l.b16 %v643
        %v718 = vunpack.c.l.b16 %v644
        %v719 = vunpack.c.l.b16 %v645
        %v720 = vunpack.c.l.b16 %v646
        %v721 = vunpack.c.l.b16 %v647
        %v722 = vunpack.c.l.b16 %v648
        %v723 = vunpack.c.l.b16 %v649
        %v724 = vunpack.c.l.b16 %v650
        %v725 = vunpack.c.l.b16 %v651
        %v726 = vunpack.c.l.b16 %v652
        %v727 = vunpack.c.l.b16 %v653
        %v728 = vunpack.c.l.b16 %v654
        %v729 = vunpack.c.l.b16 %v655
        %v730 = vunpack.c.l.b16 %v656
        %v731 = vunpack.c.l.b16 %v657
        %v732 = vunpack.c.l.b16 %v658
        %v733 = vunpack.c.l.b16 %v659
        %v734 = vunpack.c.l.b16 %v660
        %v735 = vunpack.c.l.b16 %v661
        %v736 = vunpack.c.l.b16 %v662
        %v737 = vunpack.c.l.b16 %v663
        %v738 = vunpack.c.l.b16 %v664
        %v739 = vunpack.c.l.b16 %v665
        %v740 = vpack.c.b16 %v709, %v708
        %v741 = vpack.c.b16 %v711, %v710
        %v742 = vpack.c.b16 %v713, %v712
        %v743 = vpack.c.b16 %v715, %v714
        %v744 = vpack.c.b16 %v717, %v716
        %v745 = vpack.c.b16 %v719, %v718
        %v746 = vpack.c.b16 %v721, %v720
        %v747 = vpack.c.b16 %v723, %v722
        %v748 = vpack.c.b16 %v725, %v724
        %v749 = vpack.c.b16 %v727, %v726
        %v750 = vpack.c.b16 %v729, %v728
        %v751 = vpack.c.b16 %v731, %v730
        %v752 = vpack.c.b16 %v733, %v732
        %v753 = vpack.c.b16 %v735, %v734
        %v754 = vpack.c.b16 %v737, %v736
        %v755 = vpack.c.b16 %v739, %v738
        %772 = vmatprep.subr.bf16.mxu0 0
        %773 = vmatpush1.bf16.msra.mxu0 %v747
        %774 = vmatprep.subr.bf16.mxu0 0
        %775 = vmatpush1.bf16.msra.mxu0 %v746
        %776 = vmatprep.subr.bf16.mxu0 0
        %777 = vmatpush1.bf16.msra.mxu0 %v745
        %778 = vmatprep.subr.bf16.mxu0 0
        %779 = vmatpush1.bf16.msra.mxu0 %v744
        %780 = vmatprep.subr.bf16.mxu0 0
        %781 = vmatpush1.bf16.msra.mxu0 %v743
        %782 = vmatprep.subr.bf16.mxu0 0
        %783 = vmatpush1.bf16.msra.mxu0 %v742
        %784 = vmatprep.subr.bf16.mxu0 0
        %785 = vmatpush1.bf16.msra.mxu0 %v741
        %786 = vmatprep.subr.bf16.mxu0 0
        %787 = vmatpush1.bf16.msra.mxu0 %v740
        %788 = vmatprep.subr.bf16.mxu0 0
        %789 = vmatpush2.bf16.msra.mxu0 %v755
        %790 = vmatprep.subr.bf16.mxu0 0
        %791 = vmatpush2.bf16.msra.mxu0 %v754
        %792 = vmatprep.subr.bf16.mxu0 0
        %793 = vmatpush2.bf16.msra.mxu0 %v753
        %794 = vmatprep.subr.bf16.mxu0 0
        %795 = vmatpush2.bf16.msra.mxu0 %v752
        %796 = vmatprep.subr.bf16.mxu0 0
        %797 = vmatpush2.bf16.msra.mxu0 %v751
        %798 = vmatprep.subr.bf16.mxu0 0
        %799 = vmatpush2.bf16.msra.mxu0 %v750
        %800 = vmatprep.subr.bf16.mxu0 0
        %801 = vmatpush2.bf16.msra.mxu0 %v749
        %802 = vmatprep.subr.bf16.mxu0 0
        %803 = vmatpush2.bf16.msra.mxu0 %v748
        %804 = vmatprep.mubr.bf16.mxu0 %v633
        %805 = vmatmul.mubr.bf16.gmra.mxu0 %v632
        %v806 = vpop.f32.mrf.mxu0
        %v807 = vadd.f32 %v675, %v806
        %v808 = vpop.f32.mrf.mxu0
        %v809 = vpop.f32.mrf.mxu0
        %v810 = vpop.f32.mrf.mxu0
        %811 = vdwg.mxu0
        %812 = vst [vmem:[%s406] sm:$0xff] %v807
        // Predicated region
        $region61: #{tpu_custom_call.1} parent=39 // pred_check
          %p813 = pneg %p420
        $region62: #{tpu_custom_call.1} parent=39 // pred_check_branch
          %815 = sbr.rel (%p813) target = $region64
        $region63: #{tpu_custom_call.1} parent=39 // pred_region
          %v816 = vld [vmem:[#allocation2 + $0x7] ss:$0 sm:$0xff]
          %817 = vst [vmem:[%s412] sm:$0x1] %v816
          %v818 = vld [vmem:[#allocation2 + $0xf] ss:$0 sm:$0xff]
          %819 = vst [vmem:[%s418] sm:$0x1] %v818
        $region64: #{tpu_custom_call.1} parent=39 // pred_fallthru
          _
        %s820 = sand.u32 %s176, 1
        %s821 = scalar_lea.sflag [#allocation6], %s820
        %s822 = sand.u32 %s176, 1
        %s823 = smul.addr %s822, 8
        %s824 = scalar_lea.vmem [#allocation12], %s823
        %s825 = sand.u32 %s32, 1
        %s826 = scalar_lea.sflag [#allocation14], %s825
        %s827 = sand.u32 %s202, 1
        %s828 = scalar_lea.vmem [#allocation13], %s827
        %s829 = sand.u32 %s32, 1
        %s830 = scalar_lea.sflag [#allocation14], %s829
        %s831 = sand.u32 %s228, 1
        %s832 = scalar_lea.vmem [#allocation15], %s831
        // Predicated region
        $region65: #{tpu_custom_call.1} parent=39 // pred_check
          %p833 = pneg %p186
        $region66: #{tpu_custom_call.1} parent=39 // pred_check_branch
          %835 = sbr.rel (%p833) target = $region68
        $region67: #{tpu_custom_call.1} parent=39 // pred_region
          %s837 = ssub.s32 128, 128
          %838 = vsyncadd %s821, %s837
          %s839 = sadd.s32 %s37, %s36
          %s840 = smul.addr %s839, 128
          %s841 = scalar_lea.hbm %s5, %s840
          %s843 = sshll.u32 %s824, 4
          %s844 = int_to_ptr.vmem [resolvable:$true] %s843
          %846 = dma.vmem_to_hbm [thread:$0]  %s844, 128, %s841, %s821
        $region68: #{tpu_custom_call.1} parent=39 // pred_fallthru
          _
        // Predicated region
        $region69: #{tpu_custom_call.1} parent=39 // pred_check
          %p847 = pneg %p212
        $region70: #{tpu_custom_call.1} parent=39 // pred_check_branch
          %849 = sbr.rel (%p847) target = $region72
        $region71: #{tpu_custom_call.1} parent=39 // pred_region
          %s851 = ssub.s32 16, 16
          %852 = vsyncadd %s826, %s851
          %s853 = smul.addr %s36, 16
          %s854 = scalar_lea.hbm %s6, %s853
          %s856 = sshll.u32 %s828, 4
          %s857 = int_to_ptr.vmem [resolvable:$true] %s856
          %859 = dma.vmem_to_hbm [thread:$0]  %s857, 16, %s854, %s826
        $region72: #{tpu_custom_call.1} parent=39 // pred_fallthru
          _
        // Predicated region
        $region73: #{tpu_custom_call.1} parent=39 // pred_check
          %p860 = pneg %p238
        $region74: #{tpu_custom_call.1} parent=39 // pred_check_branch
          %862 = sbr.rel (%p860) target = $region76
        $region75: #{tpu_custom_call.1} parent=39 // pred_region
          %s864 = ssub.s32 16, 16
          %865 = vsyncadd %s830, %s864
          %s866 = smul.addr %s36, 16
          %s867 = scalar_lea.hbm %s7, %s866
          %s869 = sshll.u32 %s832, 4
          %s870 = int_to_ptr.vmem [resolvable:$true] %s869
          %872 = dma.vmem_to_hbm [thread:$0]  %s870, 16, %s867, %s830
        $region76: #{tpu_custom_call.1} parent=39 // pred_fallthru
          _
      $region40: #{tpu_custom_call.1} parent=5 // pred_fallthru
        _
      %p873 = scmp.le.s32.totalorder 2, %s27
      // Predicated region
      $region77: #{tpu_custom_call.1} parent=5 // pred_check
        %p874 = pneg %p873
      $region78: #{tpu_custom_call.1} parent=5 // pred_check_branch
        %876 = sbr.rel (%p874) target = $region80
      $region79: #{tpu_custom_call.1} parent=5 // pred_region
        %s877 = ssub.s32 %s27, 2
        // Predicated region
        $region81: #{tpu_custom_call.1} parent=79 // pred_check
          %p878 = pneg %p192
        $region82: #{tpu_custom_call.1} parent=79 // pred_check_branch
          %880 = sbr.rel (%p878) target = $region84
        $region83: #{tpu_custom_call.1} parent=79 // pred_region
          %s881 = sand.u32 %s177, 1
          %s882 = scalar_lea.sflag [#allocation6], %s881
          %s883 = sand.u32 %s177, 1
          %s884 = smul.addr %s883, 8
          %s885 = scalar_lea.vmem [#allocation12], %s884
          %886 = dma.done %s882, 128
        $region84: #{tpu_custom_call.1} parent=79 // pred_fallthru
          _
        // Predicated region
        $region85: #{tpu_custom_call.1} parent=79 // pred_check
          %p887 = pneg %p218
        $region86: #{tpu_custom_call.1} parent=79 // pred_check_branch
          %889 = sbr.rel (%p887) target = $region88
        $region87: #{tpu_custom_call.1} parent=79 // pred_region
          %s890 = sand.u32 %s33, 1
          %s891 = scalar_lea.sflag [#allocation14], %s890
          %s892 = sand.u32 %s203, 1
          %s893 = scalar_lea.vmem [#allocation13], %s892
          %894 = dma.done %s891, 16
        $region88: #{tpu_custom_call.1} parent=79 // pred_fallthru
          _
        // Predicated region
        $region89: #{tpu_custom_call.1} parent=79 // pred_check
          %p895 = pneg %p244
        $region90: #{tpu_custom_call.1} parent=79 // pred_check_branch
          %897 = sbr.rel (%p895) target = $region92
        $region91: #{tpu_custom_call.1} parent=79 // pred_region
          %s898 = sand.u32 %s33, 1
          %s899 = scalar_lea.sflag [#allocation14], %s898
          %s900 = sand.u32 %s229, 1
          %s901 = scalar_lea.vmem [#allocation15], %s900
          %902 = dma.done %s899, 16
        $region92: #{tpu_custom_call.1} parent=79 // pred_fallthru
          _
      $region80: #{tpu_custom_call.1} parent=5 // pred_fallthru
        _
    $region6: #{tpu_custom_call.1} parent=1 // loop_footer
      %s31 = sadd.s32 1, %s27
    $region7: #{tpu_custom_call.1} parent=1 // loop_footer_branch
      %26 = sbr.rel target = $region3
    $region8: #{tpu_custom_call.1} parent=1 // loop_exit
      _
    %903 = vsyncpa [#allocation5], 1
    %s904 = scalar_lea.sflag [#allocation5], 1
    %905 = vsyncpa %s904, 1
    %906 = vsyncpa [#allocation8], 1
    %s907 = scalar_lea.sflag [#allocation8], 1
    %908 = vsyncpa %s907, 1
    %909 = vsyncpa [#allocation11], 1
    %910 = vsyncpa [#allocation6], 1
    %s911 = scalar_lea.sflag [#allocation6], 1
    %912 = vsyncpa %s911, 1
    %913 = vsyncpa [#allocation14], 1
    %s914 = scalar_lea.sflag [#allocation14], 1
    %915 = vsyncpa %s914, 1

</llo_original>
